<compile_context>
chip_gen: v7x
topology: tpu7x:2x2x1
jax: 0.10.0
libtpu: 0.0.40
codegen_flags: <defaults>
</compile_context>

<pallas_src>
import jax
import jax.numpy as jnp
from jax.experimental import pallas as pl
from jax.experimental.pallas import tpu as pltpu

IN_BOARD = 18    # flattened board cells
IN_RAW = 19      # board + die
H1, H2 = 128, 128
OUT = 3
OUT_PAD = 128    # lane-dense padded output width


def _fused_linear_kernel(board_ref, die_ref, w_ref, wd_ref, b_ref, out_ref):
    """One batch tile of the folded model: out = board @ W + die * w_die + b."""
    acc = jnp.dot(board_ref[...], w_ref[...],
                  preferred_element_type=jnp.float32)          # (block_b, 128)
    out_ref[...] = acc + die_ref[...] * wd_ref[...] + b_ref[...]


def init_params(key):
    """Mirror PyTorch nn.Linear default init; weights stored transposed (in, out)."""
    dims = [(IN_RAW, H1), (H1, H2), (H2, OUT)]
    params = []
    for fan_in, fan_out in dims:
        key, kw, kb = jax.random.split(key, 3)
        bound = 1.0 / jnp.sqrt(fan_in)
        w = jax.random.uniform(kw, (fan_in, fan_out), jnp.float32, -bound, bound)
        b = jax.random.uniform(kb, (1, fan_out), jnp.float32, -bound, bound)
        params += [w, b]
    return tuple(params)


def prepare_params(params):
    """One-time fold of the 3 activation-free Linears into a single affine map,
    split into board/die parts and lane-padded to 128 output columns."""
    w1, b1, w2, b2, w3, b3 = params
    w_fold = w1 @ w2 @ w3                         # (19, 3)
    b_fold = (b1 @ w2 + b2) @ w3 + b3             # (1, 3)
    pad = ((0, 0), (0, OUT_PAD - OUT))
    w_board = jnp.pad(w_fold[:IN_BOARD], pad)             # (18, 128)
    w_die = jnp.pad(w_fold[IN_BOARD:IN_RAW], pad)         # (1, 128)
    b_pad = jnp.pad(b_fold, pad)                          # (1, 128)
    return w_board, w_die, b_pad


def default_model_forward(x, die, folded_params, *, block_b=None):
    """Batched DefaultModel forward.

    x:   (B, ...) float32, each sample flattens to 18 values.
    die: (B,) int/float die values.
    folded_params: output of prepare_params (one-time weight prep).
    Returns (B, 3) float32; row b equals DefaultModel.forward(x[b], die[b]).
    """
    w_board, w_die, b_pad = folded_params
    B = x.shape[0]

    board = x.reshape(B, -1).astype(jnp.float32)           # (B, 18), free reshape
    assert board.shape[1] == IN_BOARD, "board must flatten to 18 features"
    die_col = die.reshape(B, 1).astype(jnp.float32)        # (B, 1)

    # Batch tiling: big tiles to amortize per-grid-step overhead, but keep >= 2
    # tiles for large batches so v7x's two TensorCores both get work.
    b8 = ((B + 7) // 8) * 8
    if block_b is None:
        if b8 <= 16:
            block_b = b8                                    # tiny batch: one tile
        else:
            block_b = min(1024, ((pl.cdiv(b8, 2) + 7) // 8) * 8)
    B_pad = pl.cdiv(B, block_b) * block_b
    if B_pad != B:
        board = jnp.pad(board, ((0, B_pad - B), (0, 0)))
        die_col = jnp.pad(die_col, ((0, B_pad - B), (0, 0)))
    grid = (B_pad // block_b,)

    out = pl.pallas_call(
        _fused_linear_kernel,
        out_shape=jax.ShapeDtypeStruct((B_pad, OUT_PAD), jnp.float32),
        grid_spec=pltpu.PrefetchScalarGridSpec(
            num_scalar_prefetch=0,
            grid=grid,
            in_specs=[
                # activations: new tile per grid step
                pl.BlockSpec((block_b, IN_BOARD), lambda i: (i, 0)),
                pl.BlockSpec((block_b, 1), lambda i: (i, 0)),
                # folded weights/bias: constant block index -> VMEM-resident
                pl.BlockSpec((IN_BOARD, OUT_PAD), lambda i: (0, 0)),
                pl.BlockSpec((1, OUT_PAD), lambda i: (0, 0)),
                pl.BlockSpec((1, OUT_PAD), lambda i: (0, 0)),
            ],
            out_specs=pl.BlockSpec((block_b, OUT_PAD), lambda i: (i, 0)),
        ),
        compiler_params=pltpu.CompilerParams(
            dimension_semantics=("parallel",)),
    )(board, die_col, w_board, w_die, b_pad)

    return out[:B, :OUT]


def reference_forward(x, die, params):
    """Plain-JAX reference matching DefaultModel.forward row-wise (unfolded)."""
    w1, b1, w2, b2, w3, b3 = params
    B = x.shape[0]
    feats = jnp.concatenate(
        [x.reshape(B, -1).astype(jnp.float32),
         die.reshape(B, 1).astype(jnp.float32)], axis=-1)
    h = feats @ w1 + b1
    h = h @ w2 + b2
    return h @ w3 + b3


if __name__ == "__main__":
    key = jax.random.PRNGKey(0)
    key, kx, kd = jax.random.split(key, 3)

    B = 16
    # each sample: a (3, 6) board that flattens to 18 values, plus a die roll
    x = jax.random.uniform(kx, (B, 3, 6), jnp.float32, 0.0, 1.0)
    die = jax.random.randint(kd, (B,), 1, 7, jnp.int32)

    params = init_params(key)
    folded = prepare_params(params)      # one-time weight fold + lane padding

    fwd = jax.jit(default_model_forward, static_argnames=("block_b",))
    out = jax.block_until_ready(fwd(x, die, folded))

    ref = reference_forward(x, die, params)
    assert out.shape == (B, OUT)
    assert jnp.allclose(out, ref, atol=1e-4, rtol=1e-4), "mismatch vs reference"

    print("KERNEL_OK")
</pallas_src>

<mosaic_0001>
module attributes {stable_mosaic.version = 11 : i64} {
  func.func @_fused_linear_kernel(%arg0: i32, %arg1: memref<16x18xf32, #tpu.memory_space<vmem>>, %arg2: memref<16x1xf32, #tpu.memory_space<vmem>>, %arg3: memref<18x128xf32, #tpu.memory_space<vmem>>, %arg4: memref<1x128xf32, #tpu.memory_space<vmem>>, %arg5: memref<1x128xf32, #tpu.memory_space<vmem>>, %arg6: memref<16x128xf32, #tpu.memory_space<vmem>>) attributes {dimension_semantics = [#tpu.dimension_semantics<parallel>], iteration_bounds = array<i64: 1>, scalar_prefetch = 0 : i64, scratch_operands = 0 : i64, tpu.core_type = #tpu.core_type<tc>, window_params = [{transform_indices = @transform_0, window_bounds = array<i64: 16, 18>}, {transform_indices = @transform_1, window_bounds = array<i64: 16, 1>}, {pipeline_mode = #tpu.pipeline_mode<synchronous>, transform_indices = @transform_2, window_bounds = array<i64: 18, 128>}, {pipeline_mode = #tpu.pipeline_mode<synchronous>, transform_indices = @transform_3, window_bounds = array<i64: 1, 128>}, {pipeline_mode = #tpu.pipeline_mode<synchronous>, transform_indices = @transform_4, window_bounds = array<i64: 1, 128>}, {transform_indices = @transform_5, window_bounds = array<i64: 16, 128>}]} {
    %c0 = arith.constant 0 : index
    %c0_0 = arith.constant 0 : index
    %0 = vector.load %arg1[%c0, %c0_0] : memref<16x18xf32, #tpu.memory_space<vmem>>, vector<16x18xf32>
    %c0_1 = arith.constant 0 : index
    %c0_2 = arith.constant 0 : index
    %1 = vector.load %arg3[%c0_1, %c0_2] : memref<18x128xf32, #tpu.memory_space<vmem>>, vector<18x128xf32>
    %cst = arith.constant dense<0.000000e+00> : vector<16x128xf32>
    %2 = tpu.matmul %0, %1, %cst {dimension_numbers = #tpu.dot_dimension_numbers<[1], [0], [0], [1], [0, 0, 1, 1], [], []>} : vector<16x18xf32>, vector<18x128xf32>, vector<16x128xf32> -> vector<16x128xf32>
    %c0_3 = arith.constant 0 : index
    %c0_4 = arith.constant 0 : index
    %3 = vector.load %arg2[%c0_3, %c0_4] : memref<16x1xf32, #tpu.memory_space<vmem>>, vector<16x1xf32>
    %c0_5 = arith.constant 0 : index
    %c0_6 = arith.constant 0 : index
    %4 = vector.load %arg4[%c0_5, %c0_6] : memref<1x128xf32, #tpu.memory_space<vmem>>, vector<1x128xf32>
    %5 = vector.broadcast %3 : vector<16x1xf32> to vector<16x128xf32>
    %6 = vector.broadcast %4 : vector<1x128xf32> to vector<16x128xf32>
    %7 = arith.mulf %5, %6 : vector<16x128xf32>
    %8 = arith.addf %2, %7 : vector<16x128xf32>
    %c0_7 = arith.constant 0 : index
    %c0_8 = arith.constant 0 : index
    %9 = vector.load %arg5[%c0_7, %c0_8] : memref<1x128xf32, #tpu.memory_space<vmem>>, vector<1x128xf32>
    %10 = vector.broadcast %9 : vector<1x128xf32> to vector<16x128xf32>
    %11 = arith.addf %8, %10 : vector<16x128xf32>
    %c0_9 = arith.constant 0 : index
    %c0_10 = arith.constant 0 : index
    %12 = vector.load %arg6[%c0_9, %c0_10] : memref<16x128xf32, #tpu.memory_space<vmem>>, vector<16x128xf32>
    tpu.vector_store %arg6[%c0_9, %c0_10], %11 {strides = array<i32>} : memref<16x128xf32, #tpu.memory_space<vmem>>, vector<16x128xf32>,
    return
  }
  func.func @transform_0(%arg0: i32) -> (i32, i32) {
    %c0_i32 = arith.constant 0 : i32
    %c0_i32_0 = arith.constant 0 : i32
    return %arg0, %c0_i32 : i32, i32
  }
  func.func @transform_1(%arg0: i32) -> (i32, i32) {
    %c0_i32 = arith.constant 0 : i32
    %c0_i32_0 = arith.constant 0 : i32
    return %arg0, %c0_i32 : i32, i32
  }
  func.func @transform_2(%arg0: i32) -> (i32, i32) {
    %c0_i32 = arith.constant 0 : i32
    %c0_i32_0 = arith.constant 0 : i32
    %c0_i32_1 = arith.constant 0 : i32
    return %c0_i32, %c0_i32_0 : i32, i32
  }
  func.func @transform_3(%arg0: i32) -> (i32, i32) {
    %c0_i32 = arith.constant 0 : i32
    %c0_i32_0 = arith.constant 0 : i32
    %c0_i32_1 = arith.constant 0 : i32
    return %c0_i32, %c0_i32_0 : i32, i32
  }
  func.func @transform_4(%arg0: i32) -> (i32, i32) {
    %c0_i32 = arith.constant 0 : i32
    %c0_i32_0 = arith.constant 0 : i32
    %c0_i32_1 = arith.constant 0 : i32
    return %c0_i32, %c0_i32_0 : i32, i32
  }
  func.func @transform_5(%arg0: i32) -> (i32, i32) {
    %c0_i32 = arith.constant 0 : i32
    %c0_i32_0 = arith.constant 0 : i32
    return %arg0, %c0_i32 : i32, i32
  }
}

</mosaic_0001>

<llo_original>
// kernel: default_model_forward.1
$region0: #{default_model_forward.1}
  #allocation0 [shape = 'u32[]', space=smem, size = 0x4, offset = 0x4, fixed_abs, tag = 'smem constant byte address 0x4 - core index']
  #allocation1 [shape = 'u32[144,128]{1,0:T(1,128)}', space=vmem, size = 0x12000, scoped, tag = 'internal scratch']
  %s0 = inlined_call_operand.vmem [shape: f32[16,18], index: 0, kind: input, shape index: {}]
  %s1 = inlined_call_operand.vmem [shape: f32[16,1], index: 1, kind: input, shape index: {}]
  %s2 = inlined_call_operand.vmem [shape: f32[18,128], index: 2, kind: input, shape index: {}]
  %s3 = inlined_call_operand.vmem [shape: f32[1,128], index: 3, kind: input, shape index: {}]
  %s4 = inlined_call_operand.vmem [shape: f32[1,128], index: 4, kind: input, shape index: {}]
  %s5 = inlined_call_operand.vmem [shape: f32[16,128], index: 5, kind: output, shape index: {}]
  %s6 = sld [smem:[#allocation0]]
  $region30: #{default_model_forward.1} parent=0
    _
  %s8 = ssub.s32 1, %s6
  %s9 = scalar_select 0, %s8, %s6
  // Predicated region
  $region2: #{default_model_forward.1} parent=0 // pred_check
    _
  $region3: #{default_model_forward.1} parent=0 // pred_check_branch
    %11 = sbr.rel (0) target = $region5
  $region4: #{default_model_forward.1} parent=0 // pred_region
    _
  $region5: #{default_model_forward.1} parent=0 // pred_fallthru
    _
  // Predicated region
  $region6: #{default_model_forward.1} parent=0 // pred_check
    _
  $region7: #{default_model_forward.1} parent=0 // pred_check_branch
    %13 = sbr.rel (0) target = $region9
  $region8: #{default_model_forward.1} parent=0 // pred_region
    _
  $region9: #{default_model_forward.1} parent=0 // pred_fallthru
    _
  // Predicated region
  $region10: #{default_model_forward.1} parent=0 // pred_check
    _
  $region11: #{default_model_forward.1} parent=0 // pred_check_branch
    %15 = sbr.rel (0) target = $region13
  $region12: #{default_model_forward.1} parent=0 // pred_region
    _
  $region13: #{default_model_forward.1} parent=0 // pred_fallthru
    _
  // Predicated region
  $region14: #{default_model_forward.1} parent=0 // pred_check
    _
  $region15: #{default_model_forward.1} parent=0 // pred_check_branch
    %17 = sbr.rel (0) target = $region17
  $region16: #{default_model_forward.1} parent=0 // pred_region
    _
  $region17: #{default_model_forward.1} parent=0 // pred_fallthru
    _
  // Predicated region
  $region18: #{default_model_forward.1} parent=0 // pred_check
    _
  $region19: #{default_model_forward.1} parent=0 // pred_check_branch
    %19 = sbr.rel (0) target = $region21
  $region20: #{default_model_forward.1} parent=0 // pred_region
    _
  $region21: #{default_model_forward.1} parent=0 // pred_fallthru
    _
  %v20 = vld [vmem:[%s0] sm:$0xff]
  %v21 = vld [vmem:[%s0 + $0x8] sm:$0xff]
  %v22 = vld [vmem:[%s2] sm:$0xff]
  %v23 = vld [vmem:[%s2 + $0x8] sm:$0xff]
  %v24 = vld [vmem:[%s2 + $0x10] sm:$0x3]
  %v25 = vld [vmem:[%s1] sm:$0xff]
  %v26 = vld [vmem:[%s1 + $0x8] sm:$0xff]
  %v27 = vld [vmem:[%s3] sm:$0x1]
  %29 = vset.pattern.permute.xlu0 0
  %30 = vperm.xlu0 %29, %v25
  %v31 = vpop.permute.xlu0 %30
  %34 = vset.pattern.permute.xlu0 0
  %35 = vperm.xlu0 %34, %v26
  %v36 = vpop.permute.xlu0 %35
  %v39 = vlaneseq
  %v40 = vshrl.u32 %v39, 7
  %v41 = vsub.s32 0, %v40
  %v42 = vrot.slane %v27, %v41
  %v44 = vmul.f32 %v31, %v42
  %v45 = vmul.f32 %v36, %v42
  %vm46 = vcmask 146432
  %v48 = vsel %vm46, %v20, 0
  %v51 = vsel %vm46, %v21, 0
  %vm53 = vcmask 1041408
  %v55 = vsel %vm53, %v24, 0
  %57 = vmatprep.subr.mxu0 0.0
  %58 = vmatpush1.msra.mxu0 %v22
  %59 = vmatprep.subr.mxu0 0.0
  %60 = vmatpush1.msra.mxu0 %v23
  %61 = vmatprep.subr.mxu0 0.0
  %62 = vmatpush1.msra.mxu0 %v55
  %63 = vmatprep.subr.mxu0 0.0
  %64 = vmatpush1.msra.mxu0 0.0
  %65 = vmatprep.subr.mxu0 0.0
  %66 = vmatpush1.msra.mxu0 0.0
  %67 = vmatprep.subr.mxu0 0.0
  %68 = vmatpush1.msra.mxu0 0.0
  %69 = vmatprep.subr.mxu0 0.0
  %70 = vmatpush1.msra.mxu0 0.0
  %71 = vmatprep.subr.mxu0 0.0
  %72 = vmatpush1.msra.mxu0 0.0
  %73 = vmatprep.subr.mxu0 0.0
  %74 = vmatpush1.msra.mxu0 0.0
  %75 = vmatprep.subr.mxu0 0.0
  %76 = vmatpush1.msra.mxu0 0.0
  %77 = vmatprep.subr.mxu0 0.0
  %78 = vmatpush1.msra.mxu0 0.0
  %79 = vmatprep.subr.mxu0 0.0
  %80 = vmatpush1.msra.mxu0 0.0
  %81 = vmatprep.subr.mxu0 0.0
  %82 = vmatpush1.msra.mxu0 0.0
  %83 = vmatprep.subr.mxu0 0.0
  %84 = vmatpush1.msra.mxu0 0.0
  %85 = vmatprep.subr.mxu0 0.0
  %86 = vmatpush1.msra.mxu0 0.0
  %87 = vmatprep.subr.mxu0 0.0
  %88 = vmatpush1.msra.mxu0 0.0
  %89 = vmatprep.subr.mxu0 0.0
  %90 = vmatpush1.msra.mxu0 0.0
  %91 = vmatprep.subr.mxu0 0.0
  %92 = vmatpush1.msra.mxu0 0.0
  %93 = vmatprep.subr.mxu0 0.0
  %94 = vmatpush1.msra.mxu0 0.0
  %95 = vmatprep.subr.mxu0 0.0
  %96 = vmatpush1.msra.mxu0 0.0
  %97 = vmatprep.subr.mxu0 0.0
  %98 = vmatpush1.msra.mxu0 0.0
  %99 = vmatprep.subr.mxu0 0.0
  %100 = vmatpush1.msra.mxu0 0.0
  %101 = vmatprep.subr.mxu0 0.0
  %102 = vmatpush1.msra.mxu0 0.0
  %103 = vmatprep.subr.mxu0 0.0
  %104 = vmatpush1.msra.mxu0 0.0
  %105 = vmatprep.subr.mxu0 0.0
  %106 = vmatpush1.msra.mxu0 0.0
  %107 = vmatprep.subr.mxu0 0.0
  %108 = vmatpush1.msra.mxu0 0.0
  %109 = vmatprep.subr.mxu0 0.0
  %110 = vmatpush1.msra.mxu0 0.0
  %111 = vmatprep.subr.mxu0 0.0
  %112 = vmatpush1.msra.mxu0 0.0
  %113 = vmatprep.subr.mxu0 0.0
  %114 = vmatpush1.msra.mxu0 0.0
  %115 = vmatprep.subr.mxu0 0.0
  %116 = vmatpush1.msra.mxu0 0.0
  %117 = vmatprep.subr.mxu0 0.0
  %118 = vmatpush1.msra.mxu0 0.0
  %119 = vmatprep.subr.mxu0 0.0
  %120 = vmatpush1.msra.mxu0 0.0
  %121 = vmatprep.mubr.f32.mxu0 0.0
  %122 = vmatmul.mubr.f32.gmra.mrb[0].mxu0 %v48
  %v123 = vpop.f32.mrb[0].mxu0
  %v124 = vadd.f32 %v44, %v123
  %v125 = vpop.f32.mrb[0].mxu0
  %126 = vmatprep.mubr.f32.mxu0 0.0
  %127 = vmatmul.mubr.f32.gmra.mrb[0].mxu0 %v51
  %v128 = vpop.f32.mrb[0].mxu0
  %v129 = vadd.f32 %v45, %v128
  %v130 = vpop.f32.mrb[0].mxu0
  %131 = vdwg.mxu0
  %v132 = vld [vmem:[%s4] sm:$0x1]
  %v134 = vlaneseq
  %v135 = vshrl.u32 %v134, 7
  %v136 = vsub.s32 0, %v135
  %v137 = vrot.slane %v132, %v136
  %v139 = vadd.f32 %v124, %v137
  %v140 = vadd.f32 %v129, %v137
  %141 = vst [vmem:[%s5] sm:$0xff] %v139
  %142 = vst [vmem:[%s5 + $0x8] sm:$0xff] %v140
  // Predicated region
  $region22: #{default_model_forward.1} parent=0 // pred_check
    _
  $region23: #{default_model_forward.1} parent=0 // pred_check_branch
    %144 = sbr.rel (0) target = $region25
  $region24: #{default_model_forward.1} parent=0 // pred_region
    _
  $region25: #{default_model_forward.1} parent=0 // pred_fallthru
    _
  // Predicated region
  $region26: #{default_model_forward.1} parent=0 // pred_check
    _
  $region27: #{default_model_forward.1} parent=0 // pred_check_branch
    %146 = sbr.rel (0) target = $region29
  $region28: #{default_model_forward.1} parent=0 // pred_region
    _
  $region29: #{default_model_forward.1} parent=0 // pred_fallthru
    _

</llo_original>
